<compile_context>
chip_gen: v7x
topology: tpu7x:2x2x1
jax: 0.10.0
libtpu: 0.0.40
codegen_flags: <defaults>
</compile_context>

<pallas_src>
import functools

import jax
import jax.numpy as jnp
from jax import lax
from jax.experimental import pallas as pl

# ---------------- config (small, consistent with the module) ----------------
POOL_SIZE = 8
LENGTH = 5
EMBED_DIM = 32          # prompt embedding dim (embed_dim in __init__)
KEY_DIM = 512           # self.embed_dim_key is hardcoded to 512 in the module
TOP_K = 2
BATCH = 2
EPS = 1e-12


# --------------------------------------------------------------------------
# Fused kernel: normalize + similarity + top-k + select-gather + reduce_sim
# --------------------------------------------------------------------------
def _prompt_kernel(x_ref, key_ref, pflat_ref, keys_ref, bp_ref, misc_ref, *, top_k):
    B, Dk = x_ref.shape
    P = key_ref.shape[0]
    LCP = pflat_ref.shape[1]

    x = x_ref[...]                      # (B, Dk)
    k = key_ref[...]                    # (P, Dk)
    pflat = pflat_ref[...]              # (P, LCP)  (zero-padded to lane multiple)

    # l2_normalize exactly as the module: x * rsqrt(max(sum(x^2), eps))
    xn = x * lax.rsqrt(jnp.maximum(jnp.sum(x * x, axis=1, keepdims=True), EPS))
    kn = k * lax.rsqrt(jnp.maximum(jnp.sum(k * k, axis=1, keepdims=True), EPS))
    keys_ref[0:B, :] = xn
    keys_ref[B:B + P, :] = kn

    # similarity = xn @ kn.T without materializing a transpose of kn
    sim = lax.dot_general(xn, kn,
                          dimension_numbers=(((1,), (1,)), ((), ())),
                          preferred_element_type=jnp.float32)   # (B, P)

    misc_ref[...] = jnp.zeros_like(misc_ref)   # deterministic padding lanes
    misc_ref[0:B, 0:P] = sim

    lane_pf = lax.broadcasted_iota(jnp.int32, (B, P), 1).astype(jnp.float32)

    masked = sim
    rs_rows = jnp.zeros((B, 1), jnp.float32)
    for kk in range(top_k):                                  # top_k is tiny, unrolled
        row_max = jnp.max(masked, axis=1, keepdims=True)     # (B, 1)
        cand = jnp.where(masked == row_max, lane_pf, jnp.float32(P))
        sel_f = jnp.min(cand, axis=1, keepdims=True)         # (B, 1) first occurrence
        onehot = lane_pf == sel_f                            # (B, P) bool

        # top-k index, stored as small exact float (decoded to int32 in wrapper)
        misc_ref[0:B, P + kk:P + kk + 1] = sel_f
        # selected_key[b] . xn[b] == sim[b, idx[b, kk]] == row_max -> reuse it
        rs_rows = rs_rows + row_max

        # bit-exact, NaN-safe gather of the selected rows via selects
        sel_key = jnp.zeros((B, Dk), jnp.float32)
        sel_bp = jnp.zeros((B, LCP), jnp.float32)
        for p in range(P):
            cond = onehot[:, p:p + 1]                        # (B, 1)
            sel_key = jnp.where(cond, kn[p:p + 1, :], sel_key)
            sel_bp = jnp.where(cond, pflat[p:p + 1, :], sel_bp)
        keys_ref[B + P + kk * B:B + P + (kk + 1) * B, :] = sel_key   # lane-dense
        bp_ref[kk * B:(kk + 1) * B, :] = sel_bp                      # full-lane store

        # -1e30 sentinel is safe only because similarities are cosines in [-1, 1]
        masked = jnp.where(onehot, jnp.float32(-1e30), masked)

    misc_ref[0:B, P + top_k:P + top_k + 1] = rs_rows


# --------------------------------------------------------------------------
# Forward pass wrapper (only trivial pad/slice/reshape outside the kernel)
# --------------------------------------------------------------------------
@functools.partial(jax.jit, static_argnames=("top_k",))
def prompt_forward(prompt, prompt_key, cls_features, top_k=TOP_K):
    B, Dk = cls_features.shape
    P, L, C = prompt.shape
    LC = L * C
    LC_PAD = pl.cdiv(LC, 128) * 128                 # 160 -> 256: lane-dense store
    assert P + top_k + 1 <= 128                     # misc tile layout fits one vreg row

    pflat = jnp.pad(prompt.reshape(P, LC).astype(jnp.float32),
                    ((0, 0), (0, LC_PAD - LC)))

    keys_out, bp_out, misc = pl.pallas_call(
        functools.partial(_prompt_kernel, top_k=top_k),
        out_shape=(
            # x_embed_norm rows | prompt_norm rows | selected_key rows (k-major)
            jax.ShapeDtypeStruct((B + P + top_k * B, Dk), jnp.float32),
            # gathered prompts (k-major), lane-padded
            jax.ShapeDtypeStruct((top_k * B, LC_PAD), jnp.float32),
            # similarity | top-k idx (as f32) | per-row reduce_sim partials
            jax.ShapeDtypeStruct((B, 128), jnp.float32),
        ),
    )(cls_features.astype(jnp.float32), prompt_key.astype(jnp.float32), pflat)

    x_embed_norm = keys_out[0:B]
    prompt_norm = keys_out[B:B + P]
    selected_key = keys_out[B + P:].reshape(top_k, B, Dk).transpose(1, 0, 2)
    batched_prompt = (bp_out[:, :LC].reshape(top_k, B, L, C)
                      .transpose(1, 0, 2, 3).reshape(B, top_k * L, C))

    similarity = misc[:, 0:P]
    prompt_idx = misc[:, P:P + top_k].astype(jnp.int32)      # exact small ints
    reduce_sim = jnp.sum(misc[:, P + top_k]) / B

    return dict(
        prompt_idx=prompt_idx,
        prompt_norm=prompt_norm,
        x_embed_norm=x_embed_norm,
        similarity=similarity,
        selected_key=selected_key,
        reduce_sim=reduce_sim,
        total_prompt_len=batched_prompt.shape[1],
        prompted_embedding=batched_prompt,
    )


# --------------------------------------------------------------------------
# Pure-JAX reference for a correctness check
# --------------------------------------------------------------------------
def _l2n(x):
    ss = jnp.sum(x * x, axis=1, keepdims=True)
    return x * lax.rsqrt(jnp.maximum(ss, EPS))


def prompt_forward_ref(prompt, prompt_key, cls_features, top_k=TOP_K):
    kn = _l2n(prompt_key)
    xn = _l2n(cls_features)
    sim = xn @ kn.T
    _, idx = lax.top_k(sim, top_k)
    bp = prompt[idx].reshape(cls_features.shape[0], top_k * prompt.shape[1],
                             prompt.shape[2])
    sel = kn[idx]
    rs = jnp.sum(sel * xn[:, None, :]) / cls_features.shape[0]
    return sim, idx, bp, sel, rs


# --------------------------------------------------------------------------
if __name__ == "__main__":
    key = jax.random.PRNGKey(0)
    k1, k2, k3 = jax.random.split(key, 3)

    # deterministic "uniform(-1, 1)" parameter init (synthetic)
    prompt = jax.random.uniform(k1, (POOL_SIZE, LENGTH, EMBED_DIM),
                                jnp.float32, minval=-1.0, maxval=1.0)
    prompt_key = jax.random.uniform(k2, (POOL_SIZE, KEY_DIM),
                                    jnp.float32, minval=-1.0, maxval=1.0)
    cls_features = jax.random.normal(k3, (BATCH, KEY_DIM), jnp.float32)

    out = prompt_forward(prompt, prompt_key, cls_features)
    jax.block_until_ready(out)

    # correctness checks against pure-JAX reference
    sim_r, idx_r, bp_r, sel_r, rs_r = prompt_forward_ref(
        prompt, prompt_key, cls_features)

    assert jnp.allclose(out["similarity"], sim_r, atol=1e-4)
    assert jnp.allclose(out["x_embed_norm"], _l2n(cls_features), atol=1e-5)
    assert jnp.allclose(out["prompt_norm"], _l2n(prompt_key), atol=1e-5)

    # in-kernel top-k must agree with lax.top_k on the kernel's own similarity
    _, idx_self = lax.top_k(out["similarity"], TOP_K)
    assert jnp.array_equal(out["prompt_idx"], idx_self)
    assert jnp.array_equal(out["prompt_idx"], idx_r)

    # select-gather is an exact copy of the selected rows
    assert jnp.allclose(
        out["prompted_embedding"],
        prompt[out["prompt_idx"]].reshape(BATCH, TOP_K * LENGTH, EMBED_DIM),
        atol=1e-6)
    assert jnp.allclose(out["selected_key"],
                        out["prompt_norm"][out["prompt_idx"]], atol=1e-6)

    assert jnp.allclose(out["prompted_embedding"], bp_r, atol=1e-5)
    assert jnp.allclose(out["selected_key"], sel_r, atol=1e-5)
    assert jnp.allclose(out["reduce_sim"], rs_r, atol=1e-4)
    assert out["total_prompt_len"] == TOP_K * LENGTH

    print("KERNEL_OK")
</pallas_src>

<mosaic_0001>
module attributes {stable_mosaic.version = 11 : i64} {
  func.func @_prompt_kernel(%arg0: memref<2x512xf32, #tpu.memory_space<vmem>>, %arg1: memref<8x512xf32, #tpu.memory_space<vmem>>, %arg2: memref<8x256xf32, #tpu.memory_space<vmem>>, %arg3: memref<14x512xf32, #tpu.memory_space<vmem>>, %arg4: memref<4x256xf32, #tpu.memory_space<vmem>>, %arg5: memref<2x128xf32, #tpu.memory_space<vmem>>) attributes {dimension_semantics = [], scalar_prefetch = 0 : i64, scratch_operands = 0 : i64, tpu.core_type = #tpu.core_type<tc>} {
    %c0 = arith.constant 0 : index
    %c0_0 = arith.constant 0 : index
    %0 = vector.load %arg0[%c0, %c0_0] : memref<2x512xf32, #tpu.memory_space<vmem>>, vector<2x512xf32>
    %c0_1 = arith.constant 0 : index
    %c0_2 = arith.constant 0 : index
    %1 = vector.load %arg1[%c0_1, %c0_2] : memref<8x512xf32, #tpu.memory_space<vmem>>, vector<8x512xf32>
    %c0_3 = arith.constant 0 : index
    %c0_4 = arith.constant 0 : index
    %2 = vector.load %arg2[%c0_3, %c0_4] : memref<8x256xf32, #tpu.memory_space<vmem>>, vector<8x256xf32>
    %3 = arith.mulf %0, %0 : vector<2x512xf32>
    %cst = arith.constant dense<0.000000e+00> : vector<2xf32>
    %4 = vector.multi_reduction <add>, %3, %cst [1] : vector<2x512xf32> to vector<2xf32>
    %5 = vector.shape_cast %4 : vector<2xf32> to vector<2x1xf32>
    %cst_5 = arith.constant 9.99999996E-13 : f32
    %6 = vector.broadcast %cst_5 : f32 to vector<2x1xf32>
    %7 = arith.maximumf %5, %6 : vector<2x1xf32>
    %8 = math.rsqrt %7 : vector<2x1xf32>
    %9 = vector.broadcast %8 : vector<2x1xf32> to vector<2x512xf32>
    %10 = arith.mulf %0, %9 : vector<2x512xf32>
    %11 = arith.mulf %1, %1 : vector<8x512xf32>
    %cst_6 = arith.constant dense<0.000000e+00> : vector<8xf32>
    %12 = vector.multi_reduction <add>, %11, %cst_6 [1] : vector<8x512xf32> to vector<8xf32>
    %13 = vector.shape_cast %12 : vector<8xf32> to vector<8x1xf32>
    %cst_7 = arith.constant 9.99999996E-13 : f32
    %14 = vector.broadcast %cst_7 : f32 to vector<8x1xf32>
    %15 = arith.maximumf %13, %14 : vector<8x1xf32>
    %16 = math.rsqrt %15 : vector<8x1xf32>
    %17 = vector.broadcast %16 : vector<8x1xf32> to vector<8x512xf32>
    %18 = arith.mulf %1, %17 : vector<8x512xf32>
    %c0_8 = arith.constant 0 : index
    %c0_9 = arith.constant 0 : index
    %19 = vector.load %arg3[%c0_8, %c0_9] : memref<14x512xf32, #tpu.memory_space<vmem>>, vector<2x512xf32>
    tpu.vector_store %arg3[%c0_8, %c0_9], %10 {strides = array<i32>} : memref<14x512xf32, #tpu.memory_space<vmem>>, vector<2x512xf32>,
    %c2 = arith.constant 2 : index
    %c0_10 = arith.constant 0 : index
    %20 = vector.load %arg3[%c2, %c0_10] : memref<14x512xf32, #tpu.memory_space<vmem>>, vector<8x512xf32>
    tpu.vector_store %arg3[%c2, %c0_10], %18 {strides = array<i32>} : memref<14x512xf32, #tpu.memory_space<vmem>>, vector<8x512xf32>,
    %cst_11 = arith.constant dense<0.000000e+00> : vector<2x8xf32>
    %21 = tpu.matmul %10, %18, %cst_11 {dimension_numbers = #tpu.dot_dimension_numbers<[1], [1], [0], [0], [0, 0, 1, 0], [], []>} : vector<2x512xf32>, vector<8x512xf32>, vector<2x8xf32> -> vector<2x8xf32>
    %cst_12 = arith.constant 0.000000e+00 : f32
    %22 = vector.broadcast %cst_12 : f32 to vector<2x128xf32>
    %c0_13 = arith.constant 0 : index
    %c0_14 = arith.constant 0 : index
    %23 = vector.load %arg5[%c0_13, %c0_14] : memref<2x128xf32, #tpu.memory_space<vmem>>, vector<2x128xf32>
    tpu.vector_store %arg5[%c0_13, %c0_14], %22 {strides = array<i32>} : memref<2x128xf32, #tpu.memory_space<vmem>>, vector<2x128xf32>,
    %c0_15 = arith.constant 0 : index
    %c0_16 = arith.constant 0 : index
    %24 = vector.load %arg5[%c0_15, %c0_16] : memref<2x128xf32, #tpu.memory_space<vmem>>, vector<2x8xf32>
    tpu.vector_store %arg5[%c0_15, %c0_16], %21 {strides = array<i32>} : memref<2x128xf32, #tpu.memory_space<vmem>>, vector<2x8xf32>,
    %25 = tpu.iota {dimensions = array<i32: 1>} : vector<2x8xi32>
    %26 = arith.sitofp %25 : vector<2x8xi32> to vector<2x8xf32>
    %cst_17 = arith.constant 0.000000e+00 : f32
    %27 = vector.broadcast %cst_17 : f32 to vector<2x1xf32>
    %cst_18 = arith.constant dense<0xFF800000> : vector<2xf32>
    %28 = vector.multi_reduction <maximumf>, %21, %cst_18 [1] : vector<2x8xf32> to vector<2xf32>
    %29 = vector.shape_cast %28 : vector<2xf32> to vector<2x1xf32>
    %30 = vector.broadcast %29 : vector<2x1xf32> to vector<2x8xf32>
    %31 = arith.cmpf oeq, %21, %30 : vector<2x8xf32>
    %cst_19 = arith.constant 8.000000e+00 : f32
    %32 = vector.broadcast %cst_19 : f32 to vector<2x8xf32>
    %33 = arith.select %31, %26, %32 : vector<2x8xi1>, vector<2x8xf32>
    %cst_20 = arith.constant dense<0x7F800000> : vector<2xf32>
    %34 = vector.multi_reduction <minimumf>, %33, %cst_20 [1] : vector<2x8xf32> to vector<2xf32>
    %35 = vector.shape_cast %34 : vector<2xf32> to vector<2x1xf32>
    %36 = vector.broadcast %35 : vector<2x1xf32> to vector<2x8xf32>
    %37 = arith.cmpf oeq, %26, %36 : vector<2x8xf32>
    %c0_21 = arith.constant 0 : index
    %c8 = arith.constant 8 : index
    %38 = vector.load %arg5[%c0_21, %c8] : memref<2x128xf32, #tpu.memory_space<vmem>>, vector<2x1xf32>
    tpu.vector_store %arg5[%c0_21, %c8], %35 {strides = array<i32>} : memref<2x128xf32, #tpu.memory_space<vmem>>, vector<2x1xf32>,
    %39 = arith.addf %27, %29 : vector<2x1xf32>
    %cst_22 = arith.constant 0.000000e+00 : f32
    %40 = vector.broadcast %cst_22 : f32 to vector<2x512xf32>
    %cst_23 = arith.constant 0.000000e+00 : f32
    %41 = vector.broadcast %cst_23 : f32 to vector<2x256xf32>
    %42 = vector.extract_strided_slice %37 {offsets = [0, 0], sizes = [2, 1], strides = [1, 1]} : vector<2x8xi1> to vector<2x1xi1>
    %43 = vector.extract_strided_slice %18 {offsets = [0, 0], sizes = [1, 512], strides = [1, 1]} : vector<8x512xf32> to vector<1x512xf32>
    %44 = vector.shape_cast %42 : vector<2x1xi1> to vector<2x1xi1>
    %45 = vector.broadcast %44 : vector<2x1xi1> to vector<2x512xi1>
    %46 = vector.shape_cast %43 : vector<1x512xf32> to vector<1x512xf32>
    %47 = vector.broadcast %46 : vector<1x512xf32> to vector<2x512xf32>
    %48 = arith.select %45, %47, %40 : vector<2x512xi1>, vector<2x512xf32>
    %49 = vector.extract_strided_slice %2 {offsets = [0, 0], sizes = [1, 256], strides = [1, 1]} : vector<8x256xf32> to vector<1x256xf32>
    %50 = vector.shape_cast %42 : vector<2x1xi1> to vector<2x1xi1>
    %51 = vector.broadcast %50 : vector<2x1xi1> to vector<2x256xi1>
    %52 = vector.shape_cast %49 : vector<1x256xf32> to vector<1x256xf32>
    %53 = vector.broadcast %52 : vector<1x256xf32> to vector<2x256xf32>
    %54 = arith.select %51, %53, %41 : vector<2x256xi1>, vector<2x256xf32>
    %55 = vector.extract_strided_slice %37 {offsets = [0, 1], sizes = [2, 1], strides = [1, 1]} : vector<2x8xi1> to vector<2x1xi1>
    %56 = vector.extract_strided_slice %18 {offsets = [1, 0], sizes = [1, 512], strides = [1, 1]} : vector<8x512xf32> to vector<1x512xf32>
    %57 = vector.shape_cast %55 : vector<2x1xi1> to vector<2x1xi1>
    %58 = vector.broadcast %57 : vector<2x1xi1> to vector<2x512xi1>
    %59 = vector.shape_cast %56 : vector<1x512xf32> to vector<1x512xf32>
    %60 = vector.broadcast %59 : vector<1x512xf32> to vector<2x512xf32>
    %61 = arith.select %58, %60, %48 : vector<2x512xi1>, vector<2x512xf32>
    %62 = vector.extract_strided_slice %2 {offsets = [1, 0], sizes = [1, 256], strides = [1, 1]} : vector<8x256xf32> to vector<1x256xf32>
    %63 = vector.shape_cast %55 : vector<2x1xi1> to vector<2x1xi1>
    %64 = vector.broadcast %63 : vector<2x1xi1> to vector<2x256xi1>
    %65 = vector.shape_cast %62 : vector<1x256xf32> to vector<1x256xf32>
    %66 = vector.broadcast %65 : vector<1x256xf32> to vector<2x256xf32>
    %67 = arith.select %64, %66, %54 : vector<2x256xi1>, vector<2x256xf32>
    %68 = vector.extract_strided_slice %37 {offsets = [0, 2], sizes = [2, 1], strides = [1, 1]} : vector<2x8xi1> to vector<2x1xi1>
    %69 = vector.extract_strided_slice %18 {offsets = [2, 0], sizes = [1, 512], strides = [1, 1]} : vector<8x512xf32> to vector<1x512xf32>
    %70 = vector.shape_cast %68 : vector<2x1xi1> to vector<2x1xi1>
    %71 = vector.broadcast %70 : vector<2x1xi1> to vector<2x512xi1>
    %72 = vector.shape_cast %69 : vector<1x512xf32> to vector<1x512xf32>
    %73 = vector.broadcast %72 : vector<1x512xf32> to vector<2x512xf32>
    %74 = arith.select %71, %73, %61 : vector<2x512xi1>, vector<2x512xf32>
    %75 = vector.extract_strided_slice %2 {offsets = [2, 0], sizes = [1, 256], strides = [1, 1]} : vector<8x256xf32> to vector<1x256xf32>
    %76 = vector.shape_cast %68 : vector<2x1xi1> to vector<2x1xi1>
    %77 = vector.broadcast %76 : vector<2x1xi1> to vector<2x256xi1>
    %78 = vector.shape_cast %75 : vector<1x256xf32> to vector<1x256xf32>
    %79 = vector.broadcast %78 : vector<1x256xf32> to vector<2x256xf32>
    %80 = arith.select %77, %79, %67 : vector<2x256xi1>, vector<2x256xf32>
    %81 = vector.extract_strided_slice %37 {offsets = [0, 3], sizes = [2, 1], strides = [1, 1]} : vector<2x8xi1> to vector<2x1xi1>
    %82 = vector.extract_strided_slice %18 {offsets = [3, 0], sizes = [1, 512], strides = [1, 1]} : vector<8x512xf32> to vector<1x512xf32>
    %83 = vector.shape_cast %81 : vector<2x1xi1> to vector<2x1xi1>
    %84 = vector.broadcast %83 : vector<2x1xi1> to vector<2x512xi1>
    %85 = vector.shape_cast %82 : vector<1x512xf32> to vector<1x512xf32>
    %86 = vector.broadcast %85 : vector<1x512xf32> to vector<2x512xf32>
    %87 = arith.select %84, %86, %74 : vector<2x512xi1>, vector<2x512xf32>
    %88 = vector.extract_strided_slice %2 {offsets = [3, 0], sizes = [1, 256], strides = [1, 1]} : vector<8x256xf32> to vector<1x256xf32>
    %89 = vector.shape_cast %81 : vector<2x1xi1> to vector<2x1xi1>
    %90 = vector.broadcast %89 : vector<2x1xi1> to vector<2x256xi1>
    %91 = vector.shape_cast %88 : vector<1x256xf32> to vector<1x256xf32>
    %92 = vector.broadcast %91 : vector<1x256xf32> to vector<2x256xf32>
    %93 = arith.select %90, %92, %80 : vector<2x256xi1>, vector<2x256xf32>
    %94 = vector.extract_strided_slice %37 {offsets = [0, 4], sizes = [2, 1], strides = [1, 1]} : vector<2x8xi1> to vector<2x1xi1>
    %95 = vector.extract_strided_slice %18 {offsets = [4, 0], sizes = [1, 512], strides = [1, 1]} : vector<8x512xf32> to vector<1x512xf32>
    %96 = vector.shape_cast %94 : vector<2x1xi1> to vector<2x1xi1>
    %97 = vector.broadcast %96 : vector<2x1xi1> to vector<2x512xi1>
    %98 = vector.shape_cast %95 : vector<1x512xf32> to vector<1x512xf32>
    %99 = vector.broadcast %98 : vector<1x512xf32> to vector<2x512xf32>
    %100 = arith.select %97, %99, %87 : vector<2x512xi1>, vector<2x512xf32>
    %101 = vector.extract_strided_slice %2 {offsets = [4, 0], sizes = [1, 256], strides = [1, 1]} : vector<8x256xf32> to vector<1x256xf32>
    %102 = vector.shape_cast %94 : vector<2x1xi1> to vector<2x1xi1>
    %103 = vector.broadcast %102 : vector<2x1xi1> to vector<2x256xi1>
    %104 = vector.shape_cast %101 : vector<1x256xf32> to vector<1x256xf32>
    %105 = vector.broadcast %104 : vector<1x256xf32> to vector<2x256xf32>
    %106 = arith.select %103, %105, %93 : vector<2x256xi1>, vector<2x256xf32>
    %107 = vector.extract_strided_slice %37 {offsets = [0, 5], sizes = [2, 1], strides = [1, 1]} : vector<2x8xi1> to vector<2x1xi1>
    %108 = vector.extract_strided_slice %18 {offsets = [5, 0], sizes = [1, 512], strides = [1, 1]} : vector<8x512xf32> to vector<1x512xf32>
    %109 = vector.shape_cast %107 : vector<2x1xi1> to vector<2x1xi1>
    %110 = vector.broadcast %109 : vector<2x1xi1> to vector<2x512xi1>
    %111 = vector.shape_cast %108 : vector<1x512xf32> to vector<1x512xf32>
    %112 = vector.broadcast %111 : vector<1x512xf32> to vector<2x512xf32>
    %113 = arith.select %110, %112, %100 : vector<2x512xi1>, vector<2x512xf32>
    %114 = vector.extract_strided_slice %2 {offsets = [5, 0], sizes = [1, 256], strides = [1, 1]} : vector<8x256xf32> to vector<1x256xf32>
    %115 = vector.shape_cast %107 : vector<2x1xi1> to vector<2x1xi1>
    %116 = vector.broadcast %115 : vector<2x1xi1> to vector<2x256xi1>
    %117 = vector.shape_cast %114 : vector<1x256xf32> to vector<1x256xf32>
    %118 = vector.broadcast %117 : vector<1x256xf32> to vector<2x256xf32>
    %119 = arith.select %116, %118, %106 : vector<2x256xi1>, vector<2x256xf32>
    %120 = vector.extract_strided_slice %37 {offsets = [0, 6], sizes = [2, 1], strides = [1, 1]} : vector<2x8xi1> to vector<2x1xi1>
    %121 = vector.extract_strided_slice %18 {offsets = [6, 0], sizes = [1, 512], strides = [1, 1]} : vector<8x512xf32> to vector<1x512xf32>
    %122 = vector.shape_cast %120 : vector<2x1xi1> to vector<2x1xi1>
    %123 = vector.broadcast %122 : vector<2x1xi1> to vector<2x512xi1>
    %124 = vector.shape_cast %121 : vector<1x512xf32> to vector<1x512xf32>
    %125 = vector.broadcast %124 : vector<1x512xf32> to vector<2x512xf32>
    %126 = arith.select %123, %125, %113 : vector<2x512xi1>, vector<2x512xf32>
    %127 = vector.extract_strided_slice %2 {offsets = [6, 0], sizes = [1, 256], strides = [1, 1]} : vector<8x256xf32> to vector<1x256xf32>
    %128 = vector.shape_cast %120 : vector<2x1xi1> to vector<2x1xi1>
    %129 = vector.broadcast %128 : vector<2x1xi1> to vector<2x256xi1>
    %130 = vector.shape_cast %127 : vector<1x256xf32> to vector<1x256xf32>
    %131 = vector.broadcast %130 : vector<1x256xf32> to vector<2x256xf32>
    %132 = arith.select %129, %131, %119 : vector<2x256xi1>, vector<2x256xf32>
    %133 = vector.extract_strided_slice %37 {offsets = [0, 7], sizes = [2, 1], strides = [1, 1]} : vector<2x8xi1> to vector<2x1xi1>
    %134 = vector.extract_strided_slice %18 {offsets = [7, 0], sizes = [1, 512], strides = [1, 1]} : vector<8x512xf32> to vector<1x512xf32>
    %135 = vector.shape_cast %133 : vector<2x1xi1> to vector<2x1xi1>
    %136 = vector.broadcast %135 : vector<2x1xi1> to vector<2x512xi1>
    %137 = vector.shape_cast %134 : vector<1x512xf32> to vector<1x512xf32>
    %138 = vector.broadcast %137 : vector<1x512xf32> to vector<2x512xf32>
    %139 = arith.select %136, %138, %126 : vector<2x512xi1>, vector<2x512xf32>
    %140 = vector.extract_strided_slice %2 {offsets = [7, 0], sizes = [1, 256], strides = [1, 1]} : vector<8x256xf32> to vector<1x256xf32>
    %141 = vector.shape_cast %133 : vector<2x1xi1> to vector<2x1xi1>
    %142 = vector.broadcast %141 : vector<2x1xi1> to vector<2x256xi1>
    %143 = vector.shape_cast %140 : vector<1x256xf32> to vector<1x256xf32>
    %144 = vector.broadcast %143 : vector<1x256xf32> to vector<2x256xf32>
    %145 = arith.select %142, %144, %132 : vector<2x256xi1>, vector<2x256xf32>
    %c10 = arith.constant 10 : index
    %c0_24 = arith.constant 0 : index
    %146 = vector.load %arg3[%c10, %c0_24] : memref<14x512xf32, #tpu.memory_space<vmem>>, vector<2x512xf32>
    tpu.vector_store %arg3[%c10, %c0_24], %139 {strides = array<i32>} : memref<14x512xf32, #tpu.memory_space<vmem>>, vector<2x512xf32>,
    %c0_25 = arith.constant 0 : index
    %c0_26 = arith.constant 0 : index
    %147 = vector.load %arg4[%c0_25, %c0_26] : memref<4x256xf32, #tpu.memory_space<vmem>>, vector<2x256xf32>
    tpu.vector_store %arg4[%c0_25, %c0_26], %145 {strides = array<i32>} : memref<4x256xf32, #tpu.memory_space<vmem>>, vector<2x256xf32>,
    %cst_27 = arith.constant -1.000000e+30 : f32
    %148 = vector.broadcast %cst_27 : f32 to vector<2x8xf32>
    %149 = arith.select %37, %148, %21 : vector<2x8xi1>, vector<2x8xf32>
    %cst_28 = arith.constant dense<0xFF800000> : vector<2xf32>
    %150 = vector.multi_reduction <maximumf>, %149, %cst_28 [1] : vector<2x8xf32> to vector<2xf32>
    %151 = vector.shape_cast %150 : vector<2xf32> to vector<2x1xf32>
    %152 = vector.broadcast %151 : vector<2x1xf32> to vector<2x8xf32>
    %153 = arith.cmpf oeq, %149, %152 : vector<2x8xf32>
    %cst_29 = arith.constant 8.000000e+00 : f32
    %154 = vector.broadcast %cst_29 : f32 to vector<2x8xf32>
    %155 = arith.select %153, %26, %154 : vector<2x8xi1>, vector<2x8xf32>
    %cst_30 = arith.constant dense<0x7F800000> : vector<2xf32>
    %156 = vector.multi_reduction <minimumf>, %155, %cst_30 [1] : vector<2x8xf32> to vector<2xf32>
    %157 = vector.shape_cast %156 : vector<2xf32> to vector<2x1xf32>
    %158 = vector.broadcast %157 : vector<2x1xf32> to vector<2x8xf32>
    %159 = arith.cmpf oeq, %26, %158 : vector<2x8xf32>
    %c0_31 = arith.constant 0 : index
    %c9 = arith.constant 9 : index
    %160 = vector.load %arg5[%c0_31, %c9] : memref<2x128xf32, #tpu.memory_space<vmem>>, vector<2x1xf32>
    tpu.vector_store %arg5[%c0_31, %c9], %157 {strides = array<i32>} : memref<2x128xf32, #tpu.memory_space<vmem>>, vector<2x1xf32>,
    %161 = arith.addf %39, %151 : vector<2x1xf32>
    %cst_32 = arith.constant 0.000000e+00 : f32
    %162 = vector.broadcast %cst_32 : f32 to vector<2x512xf32>
    %cst_33 = arith.constant 0.000000e+00 : f32
    %163 = vector.broadcast %cst_33 : f32 to vector<2x256xf32>
    %164 = vector.extract_strided_slice %159 {offsets = [0, 0], sizes = [2, 1], strides = [1, 1]} : vector<2x8xi1> to vector<2x1xi1>
    %165 = vector.extract_strided_slice %18 {offsets = [0, 0], sizes = [1, 512], strides = [1, 1]} : vector<8x512xf32> to vector<1x512xf32>
    %166 = vector.shape_cast %164 : vector<2x1xi1> to vector<2x1xi1>
    %167 = vector.broadcast %166 : vector<2x1xi1> to vector<2x512xi1>
    %168 = vector.shape_cast %165 : vector<1x512xf32> to vector<1x512xf32>
    %169 = vector.broadcast %168 : vector<1x512xf32> to vector<2x512xf32>
    %170 = arith.select %167, %169, %162 : vector<2x512xi1>, vector<2x512xf32>
    %171 = vector.extract_strided_slice %2 {offsets = [0, 0], sizes = [1, 256], strides = [1, 1]} : vector<8x256xf32> to vector<1x256xf32>
    %172 = vector.shape_cast %164 : vector<2x1xi1> to vector<2x1xi1>
    %173 = vector.broadcast %172 : vector<2x1xi1> to vector<2x256xi1>
    %174 = vector.shape_cast %171 : vector<1x256xf32> to vector<1x256xf32>
    %175 = vector.broadcast %174 : vector<1x256xf32> to vector<2x256xf32>
    %176 = arith.select %173, %175, %163 : vector<2x256xi1>, vector<2x256xf32>
    %177 = vector.extract_strided_slice %159 {offsets = [0, 1], sizes = [2, 1], strides = [1, 1]} : vector<2x8xi1> to vector<2x1xi1>
    %178 = vector.extract_strided_slice %18 {offsets = [1, 0], sizes = [1, 512], strides = [1, 1]} : vector<8x512xf32> to vector<1x512xf32>
    %179 = vector.shape_cast %177 : vector<2x1xi1> to vector<2x1xi1>
    %180 = vector.broadcast %179 : vector<2x1xi1> to vector<2x512xi1>
    %181 = vector.shape_cast %178 : vector<1x512xf32> to vector<1x512xf32>
    %182 = vector.broadcast %181 : vector<1x512xf32> to vector<2x512xf32>
    %183 = arith.select %180, %182, %170 : vector<2x512xi1>, vector<2x512xf32>
    %184 = vector.extract_strided_slice %2 {offsets = [1, 0], sizes = [1, 256], strides = [1, 1]} : vector<8x256xf32> to vector<1x256xf32>
    %185 = vector.shape_cast %177 : vector<2x1xi1> to vector<2x1xi1>
    %186 = vector.broadcast %185 : vector<2x1xi1> to vector<2x256xi1>
    %187 = vector.shape_cast %184 : vector<1x256xf32> to vector<1x256xf32>
    %188 = vector.broadcast %187 : vector<1x256xf32> to vector<2x256xf32>
    %189 = arith.select %186, %188, %176 : vector<2x256xi1>, vector<2x256xf32>
    %190 = vector.extract_strided_slice %159 {offsets = [0, 2], sizes = [2, 1], strides = [1, 1]} : vector<2x8xi1> to vector<2x1xi1>
    %191 = vector.extract_strided_slice %18 {offsets = [2, 0], sizes = [1, 512], strides = [1, 1]} : vector<8x512xf32> to vector<1x512xf32>
    %192 = vector.shape_cast %190 : vector<2x1xi1> to vector<2x1xi1>
    %193 = vector.broadcast %192 : vector<2x1xi1> to vector<2x512xi1>
    %194 = vector.shape_cast %191 : vector<1x512xf32> to vector<1x512xf32>
    %195 = vector.broadcast %194 : vector<1x512xf32> to vector<2x512xf32>
    %196 = arith.select %193, %195, %183 : vector<2x512xi1>, vector<2x512xf32>
    %197 = vector.extract_strided_slice %2 {offsets = [2, 0], sizes = [1, 256], strides = [1, 1]} : vector<8x256xf32> to vector<1x256xf32>
    %198 = vector.shape_cast %190 : vector<2x1xi1> to vector<2x1xi1>
    %199 = vector.broadcast %198 : vector<2x1xi1> to vector<2x256xi1>
    %200 = vector.shape_cast %197 : vector<1x256xf32> to vector<1x256xf32>
    %201 = vector.broadcast %200 : vector<1x256xf32> to vector<2x256xf32>
    %202 = arith.select %199, %201, %189 : vector<2x256xi1>, vector<2x256xf32>
    %203 = vector.extract_strided_slice %159 {offsets = [0, 3], sizes = [2, 1], strides = [1, 1]} : vector<2x8xi1> to vector<2x1xi1>
    %204 = vector.extract_strided_slice %18 {offsets = [3, 0], sizes = [1, 512], strides = [1, 1]} : vector<8x512xf32> to vector<1x512xf32>
    %205 = vector.shape_cast %203 : vector<2x1xi1> to vector<2x1xi1>
    %206 = vector.broadcast %205 : vector<2x1xi1> to vector<2x512xi1>
    %207 = vector.shape_cast %204 : vector<1x512xf32> to vector<1x512xf32>
    %208 = vector.broadcast %207 : vector<1x512xf32> to vector<2x512xf32>
    %209 = arith.select %206, %208, %196 : vector<2x512xi1>, vector<2x512xf32>
    %210 = vector.extract_strided_slice %2 {offsets = [3, 0], sizes = [1, 256], strides = [1, 1]} : vector<8x256xf32> to vector<1x256xf32>
    %211 = vector.shape_cast %203 : vector<2x1xi1> to vector<2x1xi1>
    %212 = vector.broadcast %211 : vector<2x1xi1> to vector<2x256xi1>
    %213 = vector.shape_cast %210 : vector<1x256xf32> to vector<1x256xf32>
    %214 = vector.broadcast %213 : vector<1x256xf32> to vector<2x256xf32>
    %215 = arith.select %212, %214, %202 : vector<2x256xi1>, vector<2x256xf32>
    %216 = vector.extract_strided_slice %159 {offsets = [0, 4], sizes = [2, 1], strides = [1, 1]} : vector<2x8xi1> to vector<2x1xi1>
    %217 = vector.extract_strided_slice %18 {offsets = [4, 0], sizes = [1, 512], strides = [1, 1]} : vector<8x512xf32> to vector<1x512xf32>
    %218 = vector.shape_cast %216 : vector<2x1xi1> to vector<2x1xi1>
    %219 = vector.broadcast %218 : vector<2x1xi1> to vector<2x512xi1>
    %220 = vector.shape_cast %217 : vector<1x512xf32> to vector<1x512xf32>
    %221 = vector.broadcast %220 : vector<1x512xf32> to vector<2x512xf32>
    %222 = arith.select %219, %221, %209 : vector<2x512xi1>, vector<2x512xf32>
    %223 = vector.extract_strided_slice %2 {offsets = [4, 0], sizes = [1, 256], strides = [1, 1]} : vector<8x256xf32> to vector<1x256xf32>
    %224 = vector.shape_cast %216 : vector<2x1xi1> to vector<2x1xi1>
    %225 = vector.broadcast %224 : vector<2x1xi1> to vector<2x256xi1>
    %226 = vector.shape_cast %223 : vector<1x256xf32> to vector<1x256xf32>
    %227 = vector.broadcast %226 : vector<1x256xf32> to vector<2x256xf32>
    %228 = arith.select %225, %227, %215 : vector<2x256xi1>, vector<2x256xf32>
    %229 = vector.extract_strided_slice %159 {offsets = [0, 5], sizes = [2, 1], strides = [1, 1]} : vector<2x8xi1> to vector<2x1xi1>
    %230 = vector.extract_strided_slice %18 {offsets = [5, 0], sizes = [1, 512], strides = [1, 1]} : vector<8x512xf32> to vector<1x512xf32>
    %231 = vector.shape_cast %229 : vector<2x1xi1> to vector<2x1xi1>
    %232 = vector.broadcast %231 : vector<2x1xi1> to vector<2x512xi1>
    %233 = vector.shape_cast %230 : vector<1x512xf32> to vector<1x512xf32>
    %234 = vector.broadcast %233 : vector<1x512xf32> to vector<2x512xf32>
    %235 = arith.select %232, %234, %222 : vector<2x512xi1>, vector<2x512xf32>
    %236 = vector.extract_strided_slice %2 {offsets = [5, 0], sizes = [1, 256], strides = [1, 1]} : vector<8x256xf32> to vector<1x256xf32>
    %237 = vector.shape_cast %229 : vector<2x1xi1> to vector<2x1xi1>
    %238 = vector.broadcast %237 : vector<2x1xi1> to vector<2x256xi1>
    %239 = vector.shape_cast %236 : vector<1x256xf32> to vector<1x256xf32>
    %240 = vector.broadcast %239 : vector<1x256xf32> to vector<2x256xf32>
    %241 = arith.select %238, %240, %228 : vector<2x256xi1>, vector<2x256xf32>
    %242 = vector.extract_strided_slice %159 {offsets = [0, 6], sizes = [2, 1], strides = [1, 1]} : vector<2x8xi1> to vector<2x1xi1>
    %243 = vector.extract_strided_slice %18 {offsets = [6, 0], sizes = [1, 512], strides = [1, 1]} : vector<8x512xf32> to vector<1x512xf32>
    %244 = vector.shape_cast %242 : vector<2x1xi1> to vector<2x1xi1>
    %245 = vector.broadcast %244 : vector<2x1xi1> to vector<2x512xi1>
    %246 = vector.shape_cast %243 : vector<1x512xf32> to vector<1x512xf32>
    %247 = vector.broadcast %246 : vector<1x512xf32> to vector<2x512xf32>
    %248 = arith.select %245, %247, %235 : vector<2x512xi1>, vector<2x512xf32>
    %249 = vector.extract_strided_slice %2 {offsets = [6, 0], sizes = [1, 256], strides = [1, 1]} : vector<8x256xf32> to vector<1x256xf32>
    %250 = vector.shape_cast %242 : vector<2x1xi1> to vector<2x1xi1>
    %251 = vector.broadcast %250 : vector<2x1xi1> to vector<2x256xi1>
    %252 = vector.shape_cast %249 : vector<1x256xf32> to vector<1x256xf32>
    %253 = vector.broadcast %252 : vector<1x256xf32> to vector<2x256xf32>
    %254 = arith.select %251, %253, %241 : vector<2x256xi1>, vector<2x256xf32>
    %255 = vector.extract_strided_slice %159 {offsets = [0, 7], sizes = [2, 1], strides = [1, 1]} : vector<2x8xi1> to vector<2x1xi1>
    %256 = vector.extract_strided_slice %18 {offsets = [7, 0], sizes = [1, 512], strides = [1, 1]} : vector<8x512xf32> to vector<1x512xf32>
    %257 = vector.shape_cast %255 : vector<2x1xi1> to vector<2x1xi1>
    %258 = vector.broadcast %257 : vector<2x1xi1> to vector<2x512xi1>
    %259 = vector.shape_cast %256 : vector<1x512xf32> to vector<1x512xf32>
    %260 = vector.broadcast %259 : vector<1x512xf32> to vector<2x512xf32>
    %261 = arith.select %258, %260, %248 : vector<2x512xi1>, vector<2x512xf32>
    %262 = vector.extract_strided_slice %2 {offsets = [7, 0], sizes = [1, 256], strides = [1, 1]} : vector<8x256xf32> to vector<1x256xf32>
    %263 = vector.shape_cast %255 : vector<2x1xi1> to vector<2x1xi1>
    %264 = vector.broadcast %263 : vector<2x1xi1> to vector<2x256xi1>
    %265 = vector.shape_cast %262 : vector<1x256xf32> to vector<1x256xf32>
    %266 = vector.broadcast %265 : vector<1x256xf32> to vector<2x256xf32>
    %267 = arith.select %264, %266, %254 : vector<2x256xi1>, vector<2x256xf32>
    %c12 = arith.constant 12 : index
    %c0_34 = arith.constant 0 : index
    %268 = vector.load %arg3[%c12, %c0_34] : memref<14x512xf32, #tpu.memory_space<vmem>>, vector<2x512xf32>
    tpu.vector_store %arg3[%c12, %c0_34], %261 {strides = array<i32>} : memref<14x512xf32, #tpu.memory_space<vmem>>, vector<2x512xf32>,
    %c2_35 = arith.constant 2 : index
    %c0_36 = arith.constant 0 : index
    %269 = vector.load %arg4[%c2_35, %c0_36] : memref<4x256xf32, #tpu.memory_space<vmem>>, vector<2x256xf32>
    tpu.vector_store %arg4[%c2_35, %c0_36], %267 {strides = array<i32>} : memref<4x256xf32, #tpu.memory_space<vmem>>, vector<2x256xf32>,
    %c0_37 = arith.constant 0 : index
    %c10_38 = arith.constant 10 : index
    %270 = vector.load %arg5[%c0_37, %c10_38] : memref<2x128xf32, #tpu.memory_space<vmem>>, vector<2x1xf32>
    tpu.vector_store %arg5[%c0_37, %c10_38], %161 {strides = array<i32>} : memref<2x128xf32, #tpu.memory_space<vmem>>, vector<2x1xf32>,
    return
  }
}

</mosaic_0001>

<llo_original>
// kernel: prompt_forward.1
$region0: #{prompt_forward.1}
  #allocation0 [shape = 'u32[]', space=smem, size = 0x4, offset = 0x4, fixed_abs, tag = 'smem constant byte address 0x4 - core index']
  #allocation1 [shape = 'u32[144,128]{1,0:T(1,128)}', space=vmem, size = 0x12000, scoped, tag = 'internal scratch']
  %s0 = inlined_call_operand.vmem [shape: f32[2,512], index: 0, kind: input, shape index: {}]
  %s1 = inlined_call_operand.vmem [shape: f32[8,512], index: 1, kind: input, shape index: {}]
  %s2 = inlined_call_operand.vmem [shape: f32[8,256], index: 2, kind: input, shape index: {}]
  %s3 = inlined_call_operand.vmem [shape: f32[14,512], index: 3, kind: output, shape index: {0}]
  %s4 = inlined_call_operand.vmem [shape: f32[4,256], index: 4, kind: output, shape index: {1}]
  %s5 = inlined_call_operand.vmem [shape: f32[2,128], index: 5, kind: output, shape index: {2}]
  %6 = xla_tuple %s3, %s4, %s5
  %s7 = sld [smem:[#allocation0]]
  $region38: #{prompt_forward.1} parent=0
    _
  %s9 = ssub.s32 1, %s7
  %s10 = scalar_select 0, %s9, %s7
  // Predicated region
  $region2: #{prompt_forward.1} parent=0 // pred_check
    _
  $region3: #{prompt_forward.1} parent=0 // pred_check_branch
    %12 = sbr.rel (0) target = $region5
  $region4: #{prompt_forward.1} parent=0 // pred_region
    _
  $region5: #{prompt_forward.1} parent=0 // pred_fallthru
    _
  // Predicated region
  $region6: #{prompt_forward.1} parent=0 // pred_check
    _
  $region7: #{prompt_forward.1} parent=0 // pred_check_branch
    %14 = sbr.rel (0) target = $region9
  $region8: #{prompt_forward.1} parent=0 // pred_region
    _
  $region9: #{prompt_forward.1} parent=0 // pred_fallthru
    _
  // Predicated region
  $region10: #{prompt_forward.1} parent=0 // pred_check
    _
  $region11: #{prompt_forward.1} parent=0 // pred_check_branch
    %16 = sbr.rel (0) target = $region13
  $region12: #{prompt_forward.1} parent=0 // pred_region
    _
  $region13: #{prompt_forward.1} parent=0 // pred_fallthru
    _
  %v17 = vld [vmem:[%s0] sm:$0xff]
  %v18 = vld [vmem:[%s1] sm:$0xff]
  %v19 = vld [vmem:[%s1 + $0x8] sm:$0xff]
  %v20 = vld [vmem:[%s1 + $0x10] sm:$0xff]
  %v21 = vld [vmem:[%s1 + $0x18] sm:$0xff]
  %v22 = vld [vmem:[%s2] sm:$0xff]
  %v23 = vld [vmem:[%s2 + $0x8] sm:$0xff]
  %v24 = vmul.f32 %v17, %v17
  %v26 = vcombine.high %v24, %v24
  %v28 = vunpack.c.l.s4 1983009808
  %v29 = vunpack.c.0.s8 %v28
  %v30 = vlaneseq
  %v31 = vshrl.u32 %v30, 7
  %v32 = vsub.s32 %v29, %v31
  %v33 = vrot.slane %v24, %v32
  %v35 = vunpack.c.l.s4 1983009808
  %v36 = vunpack.c.0.s8 %v35
  %v37 = vlaneseq
  %v38 = vshrl.u32 %v37, 7
  %v39 = vsub.s32 %v36, %v38
  %v40 = vrot.slane %v26, %v39
  %v41 = vcombine.high %v33, %v33
  %v42 = vcombine.high %v40, %v40
  %vm47 = vcmask 1041408
  %v48 = vsel %vm47, %v33, 0.0
  %v49 = vsel %vm47, %v41, 0.0
  %v50 = vadd.f32 %v48, %v49
  %v51 = vsel %vm47, %v40, 0.0
  %v52 = vadd.f32 %v50, %v51
  %v53 = vsel %vm47, %v42, 0.0
  %v54 = vadd.f32 %v52, %v53
  %55 = vadd.xlane.f32.xlu0 %v54
  %v56 = vpop.xlane.xlu0 %55
  %v57 = vmax.f32 %v56, 1e-12
  %v58 = vrsqrt.pop %v57
  %v61 = vunpack.c.l.s4 269488144
  %v62 = vunpack.c.0.s8 %v61
  %v63 = vlaneseq
  %v64 = vshrl.u32 %v63, 7
  %v65 = vsub.s32 %v62, %v64
  %v66 = vrot.slane %v58, %v65
  %v68 = vmul.f32 %v17, %v66
  %v69 = vmul.f32 %v18, %v18
  %v70 = vmul.f32 %v19, %v19
  %v71 = vmul.f32 %v20, %v20
  %v72 = vmul.f32 %v21, %v21
  %v73 = vadd.f32 %v69, %v70
  %v74 = vadd.f32 %v73, %v71
  %v75 = vadd.f32 %v74, %v72
  %76 = vadd.xlane.f32.xlu0 %v75
  %v77 = vpop.xlane.xlu0 %76
  %v78 = vmax.f32 %v77, 1e-12
  %v79 = vrsqrt.pop %v78
  %v80 = vmul.f32 %v18, %v79
  %v81 = vmul.f32 %v19, %v79
  %v82 = vmul.f32 %v20, %v79
  %v83 = vmul.f32 %v21, %v79
  %v85 = vcombine.high %v68, %v68
  %v87 = vunpack.c.l.s4 1983009808
  %v88 = vunpack.c.0.s8 %v87
  %v89 = vlaneseq
  %v90 = vshrl.u32 %v89, 7
  %v91 = vsub.s32 %v88, %v90
  %v92 = vrot.slane %v68, %v91
  %v94 = vunpack.c.l.s4 1983009808
  %v95 = vunpack.c.0.s8 %v94
  %v96 = vlaneseq
  %v97 = vshrl.u32 %v96, 7
  %v98 = vsub.s32 %v95, %v97
  %v99 = vrot.slane %v85, %v98
  %v100 = vcombine.high %v92, %v92
  %v101 = vcombine.high %v99, %v99
  %106 = vst [vmem:[%s3] sm:$0x3] %v92
  %107 = vst [vmem:[%s3 + $0x8] sm:$0x3] %v100
  %108 = vst [vmem:[%s3 + $0x10] sm:$0x3] %v99
  %109 = vst [vmem:[%s3 + $0x18] sm:$0x3] %v101
  %v114 = vrot.slane %v80, 6
  %v115 = vrot.slane %v81, 6
  %v116 = vrot.slane %v82, 6
  %v117 = vrot.slane %v83, 6
  %122 = vst [vmem:[%s3] sm:$0xfc] %v114
  %123 = vst [vmem:[%s3 + $0x8] sm:$0xfc] %v115
  %124 = vst [vmem:[%s3 + $0x10] sm:$0xfc] %v116
  %125 = vst [vmem:[%s3 + $0x18] sm:$0xfc] %v117
  %126 = vst [vmem:[%s3 + $0x20] sm:$0x3] %v114
  %127 = vst [vmem:[%s3 + $0x28] sm:$0x3] %v115
  %128 = vst [vmem:[%s3 + $0x30] sm:$0x3] %v116
  %129 = vst [vmem:[%s3 + $0x38] sm:$0x3] %v117
  %130 = vmatprep.subr.mxu0 %v81
  %131 = vmatpush1.xpose.msra.mxu0 %v80
  %132 = vmatprep.subr.mxu0 0.0
  %133 = vmatpush1.xpose.msra.mxu0 0.0
  %134 = vmatprep.subr.mxu0 0.0
  %135 = vmatpush1.xpose.msra.mxu0 0.0
  %136 = vmatprep.subr.mxu0 0.0
  %137 = vmatpush1.xpose.msra.mxu0 0.0
  %138 = vmatprep.subr.mxu0 0.0
  %139 = vmatpush1.xpose.msra.mxu0 0.0
  %140 = vmatprep.subr.mxu0 0.0
  %141 = vmatpush1.xpose.msra.mxu0 0.0
  %142 = vmatprep.subr.mxu0 0.0
  %143 = vmatpush1.xpose.msra.mxu0 0.0
  %144 = vmatprep.subr.mxu0 0.0
  %145 = vmatpush1.xpose.msra.mxu0 0.0
  %146 = vmatprep.subr.mxu0 0.0
  %147 = vmatpush1.xpose.msra.mxu0 0.0
  %148 = vmatprep.subr.mxu0 0.0
  %149 = vmatpush1.xpose.msra.mxu0 0.0
  %150 = vmatprep.subr.mxu0 0.0
  %151 = vmatpush1.xpose.msra.mxu0 0.0
  %152 = vmatprep.subr.mxu0 0.0
  %153 = vmatpush1.xpose.msra.mxu0 0.0
  %154 = vmatprep.subr.mxu0 0.0
  %155 = vmatpush1.xpose.msra.mxu0 0.0
  %156 = vmatprep.subr.mxu0 0.0
  %157 = vmatpush1.xpose.msra.mxu0 0.0
  %158 = vmatprep.subr.mxu0 0.0
  %159 = vmatpush1.xpose.msra.mxu0 0.0
  %160 = vmatprep.subr.mxu0 0.0
  %161 = vmatpush1.xpose.msra.mxu0 0.0
  %162 = vmatprep.subr.mxu0 0.0
  %163 = vmatpush1.xpose.msra.mxu0 0.0
  %164 = vmatprep.subr.mxu0 0.0
  %165 = vmatpush1.xpose.msra.mxu0 0.0
  %166 = vmatprep.subr.mxu0 0.0
  %167 = vmatpush1.xpose.msra.mxu0 0.0
  %168 = vmatprep.subr.mxu0 0.0
  %169 = vmatpush1.xpose.msra.mxu0 0.0
  %170 = vmatprep.subr.mxu0 0.0
  %171 = vmatpush1.xpose.msra.mxu0 0.0
  %172 = vmatprep.subr.mxu0 0.0
  %173 = vmatpush1.xpose.msra.mxu0 0.0
  %174 = vmatprep.subr.mxu0 0.0
  %175 = vmatpush1.xpose.msra.mxu0 0.0
  %176 = vmatprep.subr.mxu0 0.0
  %177 = vmatpush1.xpose.msra.mxu0 0.0
  %178 = vmatprep.subr.mxu0 0.0
  %179 = vmatpush1.xpose.msra.mxu0 0.0
  %180 = vmatprep.subr.mxu0 0.0
  %181 = vmatpush1.xpose.msra.mxu0 0.0
  %182 = vmatprep.subr.mxu0 0.0
  %183 = vmatpush1.xpose.msra.mxu0 0.0
  %184 = vmatprep.subr.mxu0 0.0
  %185 = vmatpush1.xpose.msra.mxu0 0.0
  %186 = vmatprep.subr.mxu0 0.0
  %187 = vmatpush1.xpose.msra.mxu0 0.0
  %188 = vmatprep.subr.mxu0 0.0
  %189 = vmatpush1.xpose.msra.mxu0 0.0
  %190 = vmatprep.subr.mxu0 0.0
  %191 = vmatpush1.xpose.msra.mxu0 0.0
  %192 = vmatprep.subr.mxu0 0.0
  %193 = vmatpush1.xpose.msra.mxu0 0.0
  %194 = vmatprep.mubr.f32.mxu0 %v100
  %195 = vmatmul.mubr.f32.gmra.mrb[0].mxu0 %v92
  %v196 = vpop.f32.mrb[0].mxu0
  %v197 = vadd.f32 0.0, %v196
  %v198 = vpop.f32.mrb[0].mxu0
  %199 = vdwg.mxu0
  %200 = vmatprep.subr.mxu0 %v83
  %201 = vmatpush1.xpose.msra.mxu0 %v82
  %202 = vmatprep.subr.mxu0 0.0
  %203 = vmatpush1.xpose.msra.mxu0 0.0
  %204 = vmatprep.subr.mxu0 0.0
  %205 = vmatpush1.xpose.msra.mxu0 0.0
  %206 = vmatprep.subr.mxu0 0.0
  %207 = vmatpush1.xpose.msra.mxu0 0.0
  %208 = vmatprep.subr.mxu0 0.0
  %209 = vmatpush1.xpose.msra.mxu0 0.0
  %210 = vmatprep.subr.mxu0 0.0
  %211 = vmatpush1.xpose.msra.mxu0 0.0
  %212 = vmatprep.subr.mxu0 0.0
  %213 = vmatpush1.xpose.msra.mxu0 0.0
  %214 = vmatprep.subr.mxu0 0.0
  %215 = vmatpush1.xpose.msra.mxu0 0.0
  %216 = vmatprep.subr.mxu0 0.0
  %217 = vmatpush1.xpose.msra.mxu0 0.0
  %218 = vmatprep.subr.mxu0 0.0
  %219 = vmatpush1.xpose.msra.mxu0 0.0
  %220 = vmatprep.subr.mxu0 0.0
  %221 = vmatpush1.xpose.msra.mxu0 0.0
  %222 = vmatprep.subr.mxu0 0.0
  %223 = vmatpush1.xpose.msra.mxu0 0.0
  %224 = vmatprep.subr.mxu0 0.0
  %225 = vmatpush1.xpose.msra.mxu0 0.0
  %226 = vmatprep.subr.mxu0 0.0
  %227 = vmatpush1.xpose.msra.mxu0 0.0
  %228 = vmatprep.subr.mxu0 0.0
  %229 = vmatpush1.xpose.msra.mxu0 0.0
  %230 = vmatprep.subr.mxu0 0.0
  %231 = vmatpush1.xpose.msra.mxu0 0.0
  %232 = vmatprep.subr.mxu0 0.0
  %233 = vmatpush1.xpose.msra.mxu0 0.0
  %234 = vmatprep.subr.mxu0 0.0
  %235 = vmatpush1.xpose.msra.mxu0 0.0
  %236 = vmatprep.subr.mxu0 0.0
  %237 = vmatpush1.xpose.msra.mxu0 0.0
  %238 = vmatprep.subr.mxu0 0.0
  %239 = vmatpush1.xpose.msra.mxu0 0.0
  %240 = vmatprep.subr.mxu0 0.0
  %241 = vmatpush1.xpose.msra.mxu0 0.0
  %242 = vmatprep.subr.mxu0 0.0
  %243 = vmatpush1.xpose.msra.mxu0 0.0
  %244 = vmatprep.subr.mxu0 0.0
  %245 = vmatpush1.xpose.msra.mxu0 0.0
  %246 = vmatprep.subr.mxu0 0.0
  %247 = vmatpush1.xpose.msra.mxu0 0.0
  %248 = vmatprep.subr.mxu0 0.0
  %249 = vmatpush1.xpose.msra.mxu0 0.0
  %250 = vmatprep.subr.mxu0 0.0
  %251 = vmatpush1.xpose.msra.mxu0 0.0
  %252 = vmatprep.subr.mxu0 0.0
  %253 = vmatpush1.xpose.msra.mxu0 0.0
  %254 = vmatprep.subr.mxu0 0.0
  %255 = vmatpush1.xpose.msra.mxu0 0.0
  %256 = vmatprep.subr.mxu0 0.0
  %257 = vmatpush1.xpose.msra.mxu0 0.0
  %258 = vmatprep.subr.mxu0 0.0
  %259 = vmatpush1.xpose.msra.mxu0 0.0
  %260 = vmatprep.subr.mxu0 0.0
  %261 = vmatpush1.xpose.msra.mxu0 0.0
  %262 = vmatprep.subr.mxu0 0.0
  %263 = vmatpush1.xpose.msra.mxu0 0.0
  %264 = vmatprep.mubr.f32.mxu0 %v101
  %265 = vmatmul.mubr.f32.gmra.mrb[0].mxu0 %v99
  %v266 = vpop.f32.mrb[0].mxu0
  %v267 = vadd.f32 %v197, %v266
  %v268 = vpop.f32.mrb[0].mxu0
  %269 = vdwg.mxu0
  %270 = vst [vmem:[%s5] sm:$0x3] 0.0
  %vm271 = vcmask 58368
  %272 = vst.msk [vmem:[%s5] sm:$0x3] %vm271, %v267
  %v273 = vlaneseq
  %v274 = vand.u32 %v273, 127
  %v275 = vcvt.s32.f32 %v274
  %v276 = vsel %vm271, %v267, -inf
  %277 = vmax.xlane.f32.xlu0 %v276
  %v278 = vpop.xlane.xlu0 %277
  %vm279 = vcmp.eq.f32.partialorder %v267, %v278
  %v280 = vsel %vm279, %v275, 8.0
  %v281 = vsel %vm271, %v280, inf
  %282 = vmin.xlane.f32.xlu0 %v281
  %v283 = vpop.xlane.xlu0 %282
  %vm284 = vcmp.eq.f32.partialorder %v275, %v283
  %vm285 = vcmask 66624
  %286 = vst.msk [vmem:[%s5] sm:$0x3] %vm285, %v283
  %v287 = vadd.f32 %v278, 0.0
  %v288 = vsel %vm284, 1, 0
  %289 = vset.pattern.permute.xlu0 0
  %290 = vperm.xlu0 %289, %v288
  %v291 = vpop.permute.xlu0 %290
  %vm292 = vcmp.eq.s32.totalorder %v291, 1
  %v293 = vlaneseq
  %v294 = vshrl.u32 %v293, 7
  %v295 = vsub.s32 0, %v294
  %v296 = vrot.slane %v80, %v295
  %v297 = vlaneseq
  %v298 = vshrl.u32 %v297, 7
  %v299 = vsub.s32 0, %v298
  %v300 = vrot.slane %v81, %v299
  %v301 = vlaneseq
  %v302 = vshrl.u32 %v301, 7
  %v303 = vsub.s32 0, %v302
  %v304 = vrot.slane %v82, %v303
  %v305 = vlaneseq
  %v306 = vshrl.u32 %v305, 7
  %v307 = vsub.s32 0, %v306
  %v308 = vrot.slane %v83, %v307
  %v309 = vsel %vm292, %v296, 0.0
  %v310 = vsel %vm292, %v300, 0.0
  %v311 = vsel %vm292, %v304, 0.0
  %v312 = vsel %vm292, %v308, 0.0
  %v313 = vlaneseq
  %v314 = vshrl.u32 %v313, 7
  %v315 = vsub.s32 0, %v314
  %v316 = vrot.slane %v22, %v315
  %v317 = vlaneseq
  %v318 = vshrl.u32 %v317, 7
  %v319 = vsub.s32 0, %v318
  %v320 = vrot.slane %v23, %v319
  %v321 = vsel %vm292, %v316, 0.0
  %v322 = vsel %vm292, %v320, 0.0
  %323 = vset.pattern.permute.xlu0 1
  %324 = vperm.xlu0 %323, %v288
  %v325 = vpop.permute.xlu0 %324
  %vm326 = vcmp.eq.s32.totalorder %v325, 1
  %v327 = vlaneseq
  %v328 = vshrl.u32 %v327, 7
  %v329 = vsub.s32 1, %v328
  %v330 = vrot.slane %v80, %v329
  %v331 = vlaneseq
  %v332 = vshrl.u32 %v331, 7
  %v333 = vsub.s32 1, %v332
  %v334 = vrot.slane %v81, %v333
  %v335 = vlaneseq
  %v336 = vshrl.u32 %v335, 7
  %v337 = vsub.s32 1, %v336
  %v338 = vrot.slane %v82, %v337
  %v339 = vlaneseq
  %v340 = vshrl.u32 %v339, 7
  %v341 = vsub.s32 1, %v340
  %v342 = vrot.slane %v83, %v341
  %v343 = vsel %vm326, %v330, %v309
  %v344 = vsel %vm326, %v334, %v310
  %v345 = vsel %vm326, %v338, %v311
  %v346 = vsel %vm326, %v342, %v312
  %v347 = vlaneseq
  %v348 = vshrl.u32 %v347, 7
  %v349 = vsub.s32 1, %v348
  %v350 = vrot.slane %v22, %v349
  %v351 = vlaneseq
  %v352 = vshrl.u32 %v351, 7
  %v353 = vsub.s32 1, %v352
  %v354 = vrot.slane %v23, %v353
  %v355 = vsel %vm326, %v350, %v321
  %v356 = vsel %vm326, %v354, %v322
  %357 = vset.pattern.permute.xlu0 2
  %358 = vperm.xlu0 %357, %v288
  %v359 = vpop.permute.xlu0 %358
  %vm360 = vcmp.eq.s32.totalorder %v359, 1
  %v361 = vlaneseq
  %v362 = vshrl.u32 %v361, 7
  %v363 = vsub.s32 2, %v362
  %v364 = vrot.slane %v80, %v363
  %v365 = vlaneseq
  %v366 = vshrl.u32 %v365, 7
  %v367 = vsub.s32 2, %v366
  %v368 = vrot.slane %v81, %v367
  %v369 = vlaneseq
  %v370 = vshrl.u32 %v369, 7
  %v371 = vsub.s32 2, %v370
  %v372 = vrot.slane %v82, %v371
  %v373 = vlaneseq
  %v374 = vshrl.u32 %v373, 7
  %v375 = vsub.s32 2, %v374
  %v376 = vrot.slane %v83, %v375
  %v377 = vsel %vm360, %v364, %v343
  %v378 = vsel %vm360, %v368, %v344
  %v379 = vsel %vm360, %v372, %v345
  %v380 = vsel %vm360, %v376, %v346
  %v381 = vlaneseq
  %v382 = vshrl.u32 %v381, 7
  %v383 = vsub.s32 2, %v382
  %v384 = vrot.slane %v22, %v383
  %v385 = vlaneseq
  %v386 = vshrl.u32 %v385, 7
  %v387 = vsub.s32 2, %v386
  %v388 = vrot.slane %v23, %v387
  %v389 = vsel %vm360, %v384, %v355
  %v390 = vsel %vm360, %v388, %v356
  %391 = vset.pattern.permute.xlu0 3
  %392 = vperm.xlu0 %391, %v288
  %v393 = vpop.permute.xlu0 %392
  %vm394 = vcmp.eq.s32.totalorder %v393, 1
  %v395 = vlaneseq
  %v396 = vshrl.u32 %v395, 7
  %v397 = vsub.s32 3, %v396
  %v398 = vrot.slane %v80, %v397
  %v399 = vlaneseq
  %v400 = vshrl.u32 %v399, 7
  %v401 = vsub.s32 3, %v400
  %v402 = vrot.slane %v81, %v401
  %v403 = vlaneseq
  %v404 = vshrl.u32 %v403, 7
  %v405 = vsub.s32 3, %v404
  %v406 = vrot.slane %v82, %v405
  %v407 = vlaneseq
  %v408 = vshrl.u32 %v407, 7
  %v409 = vsub.s32 3, %v408
  %v410 = vrot.slane %v83, %v409
  %v411 = vsel %vm394, %v398, %v377
  %v412 = vsel %vm394, %v402, %v378
  %v413 = vsel %vm394, %v406, %v379
  %v414 = vsel %vm394, %v410, %v380
  %v415 = vlaneseq
  %v416 = vshrl.u32 %v415, 7
  %v417 = vsub.s32 3, %v416
  %v418 = vrot.slane %v22, %v417
  %v419 = vlaneseq
  %v420 = vshrl.u32 %v419, 7
  %v421 = vsub.s32 3, %v420
  %v422 = vrot.slane %v23, %v421
  %v423 = vsel %vm394, %v418, %v389
  %v424 = vsel %vm394, %v422, %v390
  %425 = vset.pattern.permute.xlu0 4
  %426 = vperm.xlu0 %425, %v288
  %v427 = vpop.permute.xlu0 %426
  %vm428 = vcmp.eq.s32.totalorder %v427, 1
  %v429 = vlaneseq
  %v430 = vshrl.u32 %v429, 7
  %v431 = vsub.s32 4, %v430
  %v432 = vrot.slane %v80, %v431
  %v433 = vlaneseq
  %v434 = vshrl.u32 %v433, 7
  %v435 = vsub.s32 4, %v434
  %v436 = vrot.slane %v81, %v435
  %v437 = vlaneseq
  %v438 = vshrl.u32 %v437, 7
  %v439 = vsub.s32 4, %v438
  %v440 = vrot.slane %v82, %v439
  %v441 = vlaneseq
  %v442 = vshrl.u32 %v441, 7
  %v443 = vsub.s32 4, %v442
  %v444 = vrot.slane %v83, %v443
  %v445 = vsel %vm428, %v432, %v411
  %v446 = vsel %vm428, %v436, %v412
  %v447 = vsel %vm428, %v440, %v413
  %v448 = vsel %vm428, %v444, %v414
  %v449 = vlaneseq
  %v450 = vshrl.u32 %v449, 7
  %v451 = vsub.s32 4, %v450
  %v452 = vrot.slane %v22, %v451
  %v453 = vlaneseq
  %v454 = vshrl.u32 %v453, 7
  %v455 = vsub.s32 4, %v454
  %v456 = vrot.slane %v23, %v455
  %v457 = vsel %vm428, %v452, %v423
  %v458 = vsel %vm428, %v456, %v424
  %459 = vset.pattern.permute.xlu0 5
  %460 = vperm.xlu0 %459, %v288
  %v461 = vpop.permute.xlu0 %460
  %vm462 = vcmp.eq.s32.totalorder %v461, 1
  %v463 = vlaneseq
  %v464 = vshrl.u32 %v463, 7
  %v465 = vsub.s32 5, %v464
  %v466 = vrot.slane %v80, %v465
  %v467 = vlaneseq
  %v468 = vshrl.u32 %v467, 7
  %v469 = vsub.s32 5, %v468
  %v470 = vrot.slane %v81, %v469
  %v471 = vlaneseq
  %v472 = vshrl.u32 %v471, 7
  %v473 = vsub.s32 5, %v472
  %v474 = vrot.slane %v82, %v473
  %v475 = vlaneseq
  %v476 = vshrl.u32 %v475, 7
  %v477 = vsub.s32 5, %v476
  %v478 = vrot.slane %v83, %v477
  %v479 = vsel %vm462, %v466, %v445
  %v480 = vsel %vm462, %v470, %v446
  %v481 = vsel %vm462, %v474, %v447
  %v482 = vsel %vm462, %v478, %v448
  %v483 = vlaneseq
  %v484 = vshrl.u32 %v483, 7
  %v485 = vsub.s32 5, %v484
  %v486 = vrot.slane %v22, %v485
  %v487 = vlaneseq
  %v488 = vshrl.u32 %v487, 7
  %v489 = vsub.s32 5, %v488
  %v490 = vrot.slane %v23, %v489
  %v491 = vsel %vm462, %v486, %v457
  %v492 = vsel %vm462, %v490, %v458
  %493 = vset.pattern.permute.xlu0 6
  %494 = vperm.xlu0 %493, %v288
  %v495 = vpop.permute.xlu0 %494
  %vm496 = vcmp.eq.s32.totalorder %v495, 1
  %v497 = vlaneseq
  %v498 = vshrl.u32 %v497, 7
  %v499 = vsub.s32 6, %v498
  %v500 = vrot.slane %v80, %v499
  %v501 = vlaneseq
  %v502 = vshrl.u32 %v501, 7
  %v503 = vsub.s32 6, %v502
  %v504 = vrot.slane %v81, %v503
  %v505 = vlaneseq
  %v506 = vshrl.u32 %v505, 7
  %v507 = vsub.s32 6, %v506
  %v508 = vrot.slane %v82, %v507
  %v509 = vlaneseq
  %v510 = vshrl.u32 %v509, 7
  %v511 = vsub.s32 6, %v510
  %v512 = vrot.slane %v83, %v511
  %v513 = vsel %vm496, %v500, %v479
  %v514 = vsel %vm496, %v504, %v480
  %v515 = vsel %vm496, %v508, %v481
  %v516 = vsel %vm496, %v512, %v482
  %v517 = vlaneseq
  %v518 = vshrl.u32 %v517, 7
  %v519 = vsub.s32 6, %v518
  %v520 = vrot.slane %v22, %v519
  %v521 = vlaneseq
  %v522 = vshrl.u32 %v521, 7
  %v523 = vsub.s32 6, %v522
  %v524 = vrot.slane %v23, %v523
  %v525 = vsel %vm496, %v520, %v491
  %v526 = vsel %vm496, %v524, %v492
  %527 = vset.pattern.permute.xlu0 7
  %528 = vperm.xlu0 %527, %v288
  %v529 = vpop.permute.xlu0 %528
  %vm530 = vcmp.eq.s32.totalorder %v529, 1
  %v531 = vlaneseq
  %v532 = vshrl.u32 %v531, 7
  %v533 = vsub.s32 7, %v532
  %v534 = vrot.slane %v80, %v533
  %v535 = vlaneseq
  %v536 = vshrl.u32 %v535, 7
  %v537 = vsub.s32 7, %v536
  %v538 = vrot.slane %v81, %v537
  %v539 = vlaneseq
  %v540 = vshrl.u32 %v539, 7
  %v541 = vsub.s32 7, %v540
  %v542 = vrot.slane %v82, %v541
  %v543 = vlaneseq
  %v544 = vshrl.u32 %v543, 7
  %v545 = vsub.s32 7, %v544
  %v546 = vrot.slane %v83, %v545
  %v547 = vsel %vm530, %v534, %v513
  %v548 = vsel %vm530, %v538, %v514
  %v549 = vsel %vm530, %v542, %v515
  %v550 = vsel %vm530, %v546, %v516
  %v551 = vlaneseq
  %v552 = vshrl.u32 %v551, 7
  %v553 = vsub.s32 7, %v552
  %v554 = vrot.slane %v22, %v553
  %v555 = vlaneseq
  %v556 = vshrl.u32 %v555, 7
  %v557 = vsub.s32 7, %v556
  %v558 = vrot.slane %v23, %v557
  %v559 = vsel %vm530, %v554, %v525
  %v560 = vsel %vm530, %v558, %v526
  %v565 = vrot.slane %v547, 6
  %v566 = vrot.slane %v548, 6
  %v567 = vrot.slane %v549, 6
  %v568 = vrot.slane %v550, 6
  %573 = vst [vmem:[%s3 + $0x20] sm:$0xc] %v565
  %574 = vst [vmem:[%s3 + $0x28] sm:$0xc] %v566
  %575 = vst [vmem:[%s3 + $0x30] sm:$0xc] %v567
  %576 = vst [vmem:[%s3 + $0x38] sm:$0xc] %v568
  %v579 = vcombine.low %v559, %v560
  %581 = vst [vmem:[%s4] sm:$0x33] %v579
  %v582 = vsel %vm284, -1e+30, %v267
  %v583 = vsel %vm271, %v582, -inf
  %584 = vmax.xlane.f32.xlu0 %v583
  %v585 = vpop.xlane.xlu0 %584
  %vm586 = vcmp.eq.f32.partialorder %v582, %v585
  %v587 = vsel %vm586, %v275, 8.0
  %v588 = vsel %vm271, %v587, inf
  %589 = vmin.xlane.f32.xlu0 %v588
  %v590 = vpop.xlane.xlu0 %589
  %vm591 = vcmp.eq.f32.partialorder %v275, %v590
  %vm592 = vcmask 74824
  %593 = vst.msk [vmem:[%s5] sm:$0x3] %vm592, %v590
  %v594 = vadd.f32 %v287, %v585
  %v595 = vsel %vm591, 1, 0
  %596 = vset.pattern.permute.xlu0 0
  %597 = vperm.xlu0 %596, %v595
  %v598 = vpop.permute.xlu0 %597
  %vm599 = vcmp.eq.s32.totalorder %v598, 1
  %v600 = vsel %vm599, %v296, 0.0
  %v601 = vsel %vm599, %v300, 0.0
  %v602 = vsel %vm599, %v304, 0.0
  %v603 = vsel %vm599, %v308, 0.0
  %v604 = vsel %vm599, %v316, 0.0
  %v605 = vsel %vm599, %v320, 0.0
  %606 = vset.pattern.permute.xlu0 1
  %607 = vperm.xlu0 %606, %v595
  %v608 = vpop.permute.xlu0 %607
  %vm609 = vcmp.eq.s32.totalorder %v608, 1
  %v610 = vsel %vm609, %v330, %v600
  %v611 = vsel %vm609, %v334, %v601
  %v612 = vsel %vm609, %v338, %v602
  %v613 = vsel %vm609, %v342, %v603
  %v614 = vsel %vm609, %v350, %v604
  %v615 = vsel %vm609, %v354, %v605
  %616 = vset.pattern.permute.xlu0 2
  %617 = vperm.xlu0 %616, %v595
  %v618 = vpop.permute.xlu0 %617
  %vm619 = vcmp.eq.s32.totalorder %v618, 1
  %v620 = vsel %vm619, %v364, %v610
  %v621 = vsel %vm619, %v368, %v611
  %v622 = vsel %vm619, %v372, %v612
  %v623 = vsel %vm619, %v376, %v613
  %v624 = vsel %vm619, %v384, %v614
  %v625 = vsel %vm619, %v388, %v615
  %626 = vset.pattern.permute.xlu0 3
  %627 = vperm.xlu0 %626, %v595
  %v628 = vpop.permute.xlu0 %627
  %vm629 = vcmp.eq.s32.totalorder %v628, 1
  %v630 = vsel %vm629, %v398, %v620
  %v631 = vsel %vm629, %v402, %v621
  %v632 = vsel %vm629, %v406, %v622
  %v633 = vsel %vm629, %v410, %v623
  %v634 = vsel %vm629, %v418, %v624
  %v635 = vsel %vm629, %v422, %v625
  %636 = vset.pattern.permute.xlu0 4
  %637 = vperm.xlu0 %636, %v595
  %v638 = vpop.permute.xlu0 %637
  %vm639 = vcmp.eq.s32.totalorder %v638, 1
  %v640 = vsel %vm639, %v432, %v630
  %v641 = vsel %vm639, %v436, %v631
  %v642 = vsel %vm639, %v440, %v632
  %v643 = vsel %vm639, %v444, %v633
  %v644 = vsel %vm639, %v452, %v634
  %v645 = vsel %vm639, %v456, %v635
  %646 = vset.pattern.permute.xlu0 5
  %647 = vperm.xlu0 %646, %v595
  %v648 = vpop.permute.xlu0 %647
  %vm649 = vcmp.eq.s32.totalorder %v648, 1
  %v650 = vsel %vm649, %v466, %v640
  %v651 = vsel %vm649, %v470, %v641
  %v652 = vsel %vm649, %v474, %v642
  %v653 = vsel %vm649, %v478, %v643
  %v654 = vsel %vm649, %v486, %v644
  %v655 = vsel %vm649, %v490, %v645
  %656 = vset.pattern.permute.xlu0 6
  %657 = vperm.xlu0 %656, %v595
  %v658 = vpop.permute.xlu0 %657
  %vm659 = vcmp.eq.s32.totalorder %v658, 1
  %v660 = vsel %vm659, %v500, %v650
  %v661 = vsel %vm659, %v504, %v651
  %v662 = vsel %vm659, %v508, %v652
  %v663 = vsel %vm659, %v512, %v653
  %v664 = vsel %vm659, %v520, %v654
  %v665 = vsel %vm659, %v524, %v655
  %666 = vset.pattern.permute.xlu0 7
  %667 = vperm.xlu0 %666, %v595
  %v668 = vpop.permute.xlu0 %667
  %vm669 = vcmp.eq.s32.totalorder %v668, 1
  %v670 = vsel %vm669, %v534, %v660
  %v671 = vsel %vm669, %v538, %v661
  %v672 = vsel %vm669, %v542, %v662
  %v673 = vsel %vm669, %v546, %v663
  %v674 = vsel %vm669, %v554, %v664
  %v675 = vsel %vm669, %v558, %v665
  %v680 = vrot.slane %v670, 4
  %v681 = vrot.slane %v671, 4
  %v682 = vrot.slane %v672, 4
  %v683 = vrot.slane %v673, 4
  %688 = vst [vmem:[%s3 + $0x20] sm:$0x30] %v680
  %689 = vst [vmem:[%s3 + $0x28] sm:$0x30] %v681
  %690 = vst [vmem:[%s3 + $0x30] sm:$0x30] %v682
  %691 = vst [vmem:[%s3 + $0x38] sm:$0x30] %v683
  %v694 = vcombine.low %v674, %v675
  %v695 = vrot.slane %v694, 6
  %697 = vst [vmem:[%s4] sm:$0xcc] %v695
  %vm698 = vcmask 83024
  %699 = vst.msk [vmem:[%s5] sm:$0x3] %vm698, %v594
  // Predicated region
  $region14: #{prompt_forward.1} parent=0 // pred_check
    _
  $region15: #{prompt_forward.1} parent=0 // pred_check_branch
    %701 = sbr.rel (0) target = $region17
  $region16: #{prompt_forward.1} parent=0 // pred_region
    _
  $region17: #{prompt_forward.1} parent=0 // pred_fallthru
    _
  // Predicated region
  $region18: #{prompt_forward.1} parent=0 // pred_check
    _
  $region19: #{prompt_forward.1} parent=0 // pred_check_branch
    %703 = sbr.rel (0) target = $region21
  $region20: #{prompt_forward.1} parent=0 // pred_region
    _
  $region21: #{prompt_forward.1} parent=0 // pred_fallthru
    _
  // Predicated region
  $region22: #{prompt_forward.1} parent=0 // pred_check
    _
  $region23: #{prompt_forward.1} parent=0 // pred_check_branch
    %705 = sbr.rel (0) target = $region25
  $region24: #{prompt_forward.1} parent=0 // pred_region
    _
  $region25: #{prompt_forward.1} parent=0 // pred_fallthru
    _
  // Predicated region
  $region26: #{prompt_forward.1} parent=0 // pred_check
    _
  $region27: #{prompt_forward.1} parent=0 // pred_check_branch
    %707 = sbr.rel (0) target = $region29
  $region28: #{prompt_forward.1} parent=0 // pred_region
    _
  $region29: #{prompt_forward.1} parent=0 // pred_fallthru
    _
  // Predicated region
  $region30: #{prompt_forward.1} parent=0 // pred_check
    _
  $region31: #{prompt_forward.1} parent=0 // pred_check_branch
    %709 = sbr.rel (0) target = $region33
  $region32: #{prompt_forward.1} parent=0 // pred_region
    _
  $region33: #{prompt_forward.1} parent=0 // pred_fallthru
    _
  // Predicated region
  $region34: #{prompt_forward.1} parent=0 // pred_check
    _
  $region35: #{prompt_forward.1} parent=0 // pred_check_branch
    %711 = sbr.rel (0) target = $region37
  $region36: #{prompt_forward.1} parent=0 // pred_region
    _
  $region37: #{prompt_forward.1} parent=0 // pred_fallthru
    _

</llo_original>
